<compile_context>
chip_gen: v7x
topology: tpu7x:2x2x1
jax: 0.10.0
libtpu: 0.0.40
codegen_flags: <defaults>
</compile_context>

<pallas_src>
import functools

import jax
import jax.numpy as jnp
from jax import lax
from jax.experimental import pallas as pl
from jax.experimental.pallas import tpu as pltpu


def _fast_reciprocal(x):
    # EUP approximate reciprocal (keeps the divide off the VALU slots) followed by one
    # Newton-Raphson step; safe here because the softmax denominator is >= 1 after
    # max-subtraction.
    r = pl.reciprocal(x, approx=True)
    return r * (2.0 - x * r)


# ---------------------------------------------------------------------------
# Fused kernel: per-head projection + scaled-dot-product attention + per-head
# output-projection accumulation; residual + LayerNormalization on the last head.
# Grid = (B, n_head); batch is "parallel", head is the "arbitrary" reduction axis.
# ---------------------------------------------------------------------------
def fused_mha_kernel(q_ref, k_ref, v_ref, wq_ref, wk_ref, wv_ref, wp_ref,
                     bp_ref, g_ref, b_ref,
                     out_ref, attn_ref,
                     acc_ref,
                     *, d_model, eps, mxu_dtype):
    h = pl.program_id(1)
    last_h = pl.num_programs(1) - 1

    q = q_ref[0]            # (L, d_model) -- also the residual
    k = k_ref[0]            # (L, d_model)
    v = v_ref[0]            # (L, d_model)

    def to_mxu(x):
        return x if x.dtype == mxu_dtype else x.astype(mxu_dtype)

    @pl.when(h == 0)
    def _():
        acc_ref[...] = jnp.zeros_like(acc_ref)

    # Per-head projections; the 1/sqrt(d_model) scale is folded into wq on the host.
    qh = jnp.dot(to_mxu(q), wq_ref[0], preferred_element_type=jnp.float32)   # (L, d_k)
    kh = jnp.dot(to_mxu(k), wk_ref[0], preferred_element_type=jnp.float32)   # (L, d_k)
    vh = jnp.dot(to_mxu(v), wv_ref[0], preferred_element_type=jnp.float32)   # (L, d_v)

    # q · k^T: contract last dims directly (no in-kernel transpose).
    scores = lax.dot_general(
        to_mxu(qh), to_mxu(kh),
        dimension_numbers=(((1,), (1,)), ((), ())),
        preferred_element_type=jnp.float32)                                  # (L, L)

    scores = scores - jnp.max(scores, axis=-1, keepdims=True)
    e = jnp.exp(scores)
    attn = e * _fast_reciprocal(jnp.sum(e, axis=-1, keepdims=True))
    attn_ref[0, 0] = attn.astype(attn_ref.dtype)

    out_h = jnp.dot(to_mxu(attn), to_mxu(vh),
                    preferred_element_type=jnp.float32)                      # (L, d_v)

    # Per-head slice of the output projection, accumulated in f32 scratch (replaces
    # concat + wide matmul).
    acc_ref[...] += jnp.dot(to_mxu(out_h), wp_ref[0],
                            preferred_element_type=jnp.float32)              # (L, d_model)

    @pl.when(h == last_h)
    def _():
        # bias + residual + LayerNormalization (unbiased std, eps added to std).
        z = acc_ref[...] + bp_ref[...] + q.astype(jnp.float32)
        mu = jnp.mean(z, axis=-1, keepdims=True)
        var = jnp.sum((z - mu) ** 2, axis=-1, keepdims=True) / (d_model - 1)
        # True divide here: sqrt(var)+eps can be small for near-constant rows, so the
        # approx-reciprocal path is not used (cost is one (L,1) divide).
        ln = (z - mu) / (jnp.sqrt(var) + eps)
        out_ref[0] = (ln * g_ref[...] + b_ref[...]).astype(out_ref.dtype)


def multi_head_attention(q, k, v, params, *, n_head, d_k, d_v,
                         mxu_dtype=jnp.float32, attn_out_dtype=jnp.float32):
    B, L, d_model = q.shape
    w_qs, w_ks, w_vs, w_proj, b_proj, gamma, beta = params
    scale = 1.0 / (d_model ** 0.5)

    # Host-side (one-time, tiny) weight prep: fold the score scale into wq, reshape the
    # output projection into per-head (d_v, d_model) slabs, and cast to the MXU operand
    # dtype once (no per-grid-step casts of invariant weights inside the kernel).
    wq = (w_qs * scale).astype(mxu_dtype)                       # (n_head, d_model, d_k)
    wk = w_ks.astype(mxu_dtype)                                 # (n_head, d_model, d_k)
    wv = w_vs.astype(mxu_dtype)                                 # (n_head, d_model, d_v)
    wp = w_proj.T.reshape(n_head, d_v, d_model).astype(mxu_dtype)  # (n_head, d_v, d_model)

    kernel = functools.partial(
        fused_mha_kernel, d_model=d_model, eps=1e-3, mxu_dtype=mxu_dtype)

    # --- VMEM budget for the per-step working set (double-buffered inputs/outputs). ---
    f32 = 4
    w_item = jnp.dtype(mxu_dtype).itemsize
    attn_item = jnp.dtype(attn_out_dtype).itemsize
    act_bytes = L * d_model * f32
    working = (2 * 3 * act_bytes                                   # q, k, v blocks
               + 2 * (2 * d_model * d_k + d_model * d_v + d_v * d_model) * w_item
               + 2 * 3 * d_model * f32                             # bias / gamma / beta
               + 2 * L * L * attn_item                             # attn output block
               + 2 * act_bytes                                     # out block
               + act_bytes)                                        # acc scratch
    vmem_limit = int(min(64 * 2**20, max(16 * 2**20, 2 * working)))

    # --- Advisory cost estimate for XLA scheduling around the custom call. ---
    flops = 2 * B * n_head * (L * d_model * (2 * d_k + d_v)        # q/k/v projections
                              + L * L * (d_k + d_v)                # qk^T and attn@v
                              + L * d_v * d_model)                 # output projection
    transcendentals = B * n_head * L * L                           # exp
    bytes_accessed = (3 * B * L * d_model * q.dtype.itemsize
                      + (wq.size + wk.size + wv.size + wp.size) * w_item
                      + B * L * d_model * f32
                      + n_head * B * L * L * attn_item)

    # TODO(synk): for very long sequences the monolithic (L, L) per-head score block should
    # be replaced by a KV-tiled (flash-style) online softmax with a query-tile grid axis;
    # at these shapes the full block fits comfortably.
    out, attn = pl.pallas_call(
        kernel,
        out_shape=(
            jax.ShapeDtypeStruct((B, L, d_model), jnp.float32),
            jax.ShapeDtypeStruct((n_head, B, L, L), attn_out_dtype),
        ),
        grid=(B, n_head),
        in_specs=[
            pl.BlockSpec((1, L, d_model), lambda b, h: (b, 0, 0)),
            pl.BlockSpec((1, L, d_model), lambda b, h: (b, 0, 0)),
            pl.BlockSpec((1, L, d_model), lambda b, h: (b, 0, 0)),
            pl.BlockSpec((1, d_model, d_k), lambda b, h: (h, 0, 0)),
            pl.BlockSpec((1, d_model, d_k), lambda b, h: (h, 0, 0)),
            pl.BlockSpec((1, d_model, d_v), lambda b, h: (h, 0, 0)),
            pl.BlockSpec((1, d_v, d_model), lambda b, h: (h, 0, 0)),
            pl.BlockSpec((1, d_model), lambda b, h: (0, 0)),
            pl.BlockSpec((1, d_model), lambda b, h: (0, 0)),
            pl.BlockSpec((1, d_model), lambda b, h: (0, 0)),
        ],
        out_specs=(
            pl.BlockSpec((1, L, d_model), lambda b, h: (b, 0, 0)),
            # Head-major attention layout so the final reshape to (n_head*B, L, L) is a
            # free contiguous view (matches the PyTorch return ordering).
            pl.BlockSpec((1, 1, L, L), lambda b, h: (h, b, 0, 0)),
        ),
        scratch_shapes=[pltpu.VMEM((L, d_model), jnp.float32)],
        compiler_params=pltpu.CompilerParams(
            dimension_semantics=("parallel", "arbitrary"),
            vmem_limit_bytes=vmem_limit),
        cost_estimate=pl.CostEstimate(flops=flops,
                                      transcendentals=transcendentals,
                                      bytes_accessed=bytes_accessed),
    )(q, k, v, wq, wk, wv, wp,
      b_proj[None, :], gamma[None, :], beta[None, :])

    attns = attn.reshape(n_head * B, L, L)   # head-major, matches PyTorch return
    return out, attns


def reference(q, k, v, params, *, n_head, d_k, d_v):
    """Pure-JAX reference mirroring the PyTorch forward (eval mode)."""
    w_qs, w_ks, w_vs, w_proj, b_proj, gamma, beta = params
    B, L, d_model = q.shape
    qh = jnp.einsum("bld,hdk->hblk", q, w_qs)
    kh = jnp.einsum("bld,hdk->hblk", k, w_ks)
    vh = jnp.einsum("bld,hdv->hblv", v, w_vs)
    scores = jnp.einsum("hbqk,hbsk->hbqs", qh, kh) / (d_model ** 0.5)
    attn = jax.nn.softmax(scores, axis=-1)
    outh = jnp.einsum("hbqs,hbsv->hbqv", attn, vh)
    cat = jnp.transpose(outh, (1, 2, 0, 3)).reshape(B, L, n_head * d_v)
    y = cat @ w_proj.T + b_proj
    z = y + q
    mu = jnp.mean(z, axis=-1, keepdims=True)
    var = jnp.sum((z - mu) ** 2, axis=-1, keepdims=True) / (d_model - 1)
    ln = (z - mu) / (jnp.sqrt(var) + 1e-3)
    return ln * gamma + beta, attn.reshape(n_head * B, L, L)


if __name__ == "__main__":
    n_head, d_model, d_k, d_v = 4, 32, 8, 8
    B, L = 2, 8

    key = jax.random.PRNGKey(0)
    ks = jax.random.split(key, 8)

    def xavier_normal(k, shape, fan_in, fan_out):
        std = (2.0 / (fan_in + fan_out)) ** 0.5
        return std * jax.random.normal(k, shape, dtype=jnp.float32)

    # Parameters (deterministic, synthetic init matching module shapes).
    w_qs = xavier_normal(ks[0], (n_head, d_model, d_k), d_model * d_k, n_head * d_k)
    w_ks = xavier_normal(ks[1], (n_head, d_model, d_k), d_model * d_k, n_head * d_k)
    w_vs = xavier_normal(ks[2], (n_head, d_model, d_v), d_model * d_v, n_head * d_v)
    w_proj = xavier_normal(ks[3], (d_model, n_head * d_v), n_head * d_v, d_model)
    b_proj = 0.01 * jax.random.normal(ks[4], (d_model,), dtype=jnp.float32)
    gamma = jnp.ones((d_model,), dtype=jnp.float32)
    beta = jnp.zeros((d_model,), dtype=jnp.float32)
    params = (w_qs, w_ks, w_vs, w_proj, b_proj, gamma, beta)

    # Inputs (B, L, d_model).
    q = jax.random.normal(ks[5], (B, L, d_model), dtype=jnp.float32)
    k = jax.random.normal(ks[6], (B, L, d_model), dtype=jnp.float32)
    v = jax.random.normal(ks[7], (B, L, d_model), dtype=jnp.float32)

    # TODO(synk): dropout layers are identity here (inference semantics); training-mode
    # dropout masks are not implemented.
    # NOTE: on v6e/v7x production runs, pass mxu_dtype=jnp.bfloat16 (weights are cast once
    # on the host, f32 accumulation kept) and optionally attn_out_dtype=jnp.bfloat16 to
    # halve the attn writeback; tolerances below assume the f32 path.
    out, attns = multi_head_attention(q, k, v, params, n_head=n_head, d_k=d_k, d_v=d_v,
                                      mxu_dtype=jnp.float32,
                                      attn_out_dtype=jnp.float32)
    out, attns = jax.block_until_ready(out), jax.block_until_ready(attns)

    ref_out, ref_attns = reference(q, k, v, params, n_head=n_head, d_k=d_k, d_v=d_v)
    assert out.shape == (B, L, d_model)
    assert attns.shape == (n_head * B, L, L)
    assert jnp.allclose(out, ref_out, atol=1e-4, rtol=1e-4)
    assert jnp.allclose(attns, ref_attns, atol=1e-4, rtol=1e-4)

    print("KERNEL_OK")
</pallas_src>

<mosaic_0001>
module attributes {stable_mosaic.version = 11 : i64} {
  func.func @fused_mha_kernel(%arg0: i32, %arg1: i32, %arg2: memref<1x8x32xf32, #tpu.memory_space<vmem>>, %arg3: memref<1x8x32xf32, #tpu.memory_space<vmem>>, %arg4: memref<1x8x32xf32, #tpu.memory_space<vmem>>, %arg5: memref<1x32x8xf32, #tpu.memory_space<vmem>>, %arg6: memref<1x32x8xf32, #tpu.memory_space<vmem>>, %arg7: memref<1x32x8xf32, #tpu.memory_space<vmem>>, %arg8: memref<1x8x32xf32, #tpu.memory_space<vmem>>, %arg9: memref<1x32xf32, #tpu.memory_space<vmem>>, %arg10: memref<1x32xf32, #tpu.memory_space<vmem>>, %arg11: memref<1x32xf32, #tpu.memory_space<vmem>>, %arg12: memref<1x8x32xf32, #tpu.memory_space<vmem>>, %arg13: memref<1x1x8x8xf32, #tpu.memory_space<vmem>>, %arg14: memref<8x32xf32, #tpu.memory_space<vmem>>) attributes {dimension_semantics = [#tpu.dimension_semantics<parallel>, #tpu.dimension_semantics<arbitrary>], iteration_bounds = array<i64: 2, 4>, scalar_prefetch = 0 : i64, scratch_operands = 1 : i64, tpu.core_type = #tpu.core_type<tc>, window_params = [{transform_indices = @transform_0, window_bounds = array<i64: 1, 8, 32>}, {transform_indices = @transform_1, window_bounds = array<i64: 1, 8, 32>}, {transform_indices = @transform_2, window_bounds = array<i64: 1, 8, 32>}, {transform_indices = @transform_3, window_bounds = array<i64: 1, 32, 8>}, {transform_indices = @transform_4, window_bounds = array<i64: 1, 32, 8>}, {transform_indices = @transform_5, window_bounds = array<i64: 1, 32, 8>}, {transform_indices = @transform_6, window_bounds = array<i64: 1, 8, 32>}, {pipeline_mode = #tpu.pipeline_mode<synchronous>, transform_indices = @transform_7, window_bounds = array<i64: 1, 32>}, {pipeline_mode = #tpu.pipeline_mode<synchronous>, transform_indices = @transform_8, window_bounds = array<i64: 1, 32>}, {pipeline_mode = #tpu.pipeline_mode<synchronous>, transform_indices = @transform_9, window_bounds = array<i64: 1, 32>}, {transform_indices = @transform_10, window_bounds = array<i64: 1, 8, 32>}, {transform_indices = @transform_11, window_bounds = array<i64: 1, 1, 8, 8>}]} {
    %c0 = arith.constant 0 : index
    %c0_0 = arith.constant 0 : index
    %c0_1 = arith.constant 0 : index
    %0 = vector.load %arg2[%c0, %c0_0, %c0_1] : memref<1x8x32xf32, #tpu.memory_space<vmem>>, vector<1x8x32xf32>
    %1 = vector.shape_cast %0 : vector<1x8x32xf32> to vector<8x32xf32>
    %c0_2 = arith.constant 0 : index
    %c0_3 = arith.constant 0 : index
    %c0_4 = arith.constant 0 : index
    %2 = vector.load %arg3[%c0_2, %c0_3, %c0_4] : memref<1x8x32xf32, #tpu.memory_space<vmem>>, vector<1x8x32xf32>
    %3 = vector.shape_cast %2 : vector<1x8x32xf32> to vector<8x32xf32>
    %c0_5 = arith.constant 0 : index
    %c0_6 = arith.constant 0 : index
    %c0_7 = arith.constant 0 : index
    %4 = vector.load %arg4[%c0_5, %c0_6, %c0_7] : memref<1x8x32xf32, #tpu.memory_space<vmem>>, vector<1x8x32xf32>
    %5 = vector.shape_cast %4 : vector<1x8x32xf32> to vector<8x32xf32>
    %c0_i32 = arith.constant 0 : i32
    %6 = arith.cmpi eq, %arg1, %c0_i32 : i32
    %7 = arith.extui %6 : i1 to i32
    %c0_i32_8 = arith.constant 0 : i32
    %8 = arith.cmpi ne, %7, %c0_i32_8 : i32
    scf.if %8 {
      %cst_38 = arith.constant 0.000000e+00 : f32
      %46 = vector.broadcast %cst_38 : f32 to vector<8x32xf32>
      %c0_39 = arith.constant 0 : index
      %c0_40 = arith.constant 0 : index
      %47 = vector.load %arg14[%c0_39, %c0_40] : memref<8x32xf32, #tpu.memory_space<vmem>>, vector<8x32xf32>
      tpu.vector_store %arg14[%c0_39, %c0_40], %46 {strides = array<i32>} : memref<8x32xf32, #tpu.memory_space<vmem>>, vector<8x32xf32>,
    } else {
    }
    %c0_9 = arith.constant 0 : index
    %c0_10 = arith.constant 0 : index
    %c0_11 = arith.constant 0 : index
    %9 = vector.load %arg5[%c0_9, %c0_10, %c0_11] : memref<1x32x8xf32, #tpu.memory_space<vmem>>, vector<1x32x8xf32>
    %10 = vector.shape_cast %9 : vector<1x32x8xf32> to vector<32x8xf32>
    %cst = arith.constant dense<0.000000e+00> : vector<8x8xf32>
    %11 = tpu.matmul %1, %10, %cst {dimension_numbers = #tpu.dot_dimension_numbers<[1], [0], [0], [1], [0, 0, 1, 1], [], []>} : vector<8x32xf32>, vector<32x8xf32>, vector<8x8xf32> -> vector<8x8xf32>
    %c0_12 = arith.constant 0 : index
    %c0_13 = arith.constant 0 : index
    %c0_14 = arith.constant 0 : index
    %12 = vector.load %arg6[%c0_12, %c0_13, %c0_14] : memref<1x32x8xf32, #tpu.memory_space<vmem>>, vector<1x32x8xf32>
    %13 = vector.shape_cast %12 : vector<1x32x8xf32> to vector<32x8xf32>
    %cst_15 = arith.constant dense<0.000000e+00> : vector<8x8xf32>
    %14 = tpu.matmul %3, %13, %cst_15 {dimension_numbers = #tpu.dot_dimension_numbers<[1], [0], [0], [1], [0, 0, 1, 1], [], []>} : vector<8x32xf32>, vector<32x8xf32>, vector<8x8xf32> -> vector<8x8xf32>
    %c0_16 = arith.constant 0 : index
    %c0_17 = arith.constant 0 : index
    %c0_18 = arith.constant 0 : index
    %15 = vector.load %arg7[%c0_16, %c0_17, %c0_18] : memref<1x32x8xf32, #tpu.memory_space<vmem>>, vector<1x32x8xf32>
    %16 = vector.shape_cast %15 : vector<1x32x8xf32> to vector<32x8xf32>
    %cst_19 = arith.constant dense<0.000000e+00> : vector<8x8xf32>
    %17 = tpu.matmul %5, %16, %cst_19 {dimension_numbers = #tpu.dot_dimension_numbers<[1], [0], [0], [1], [0, 0, 1, 1], [], []>} : vector<8x32xf32>, vector<32x8xf32>, vector<8x8xf32> -> vector<8x8xf32>
    %cst_20 = arith.constant dense<0.000000e+00> : vector<8x8xf32>
    %18 = tpu.matmul %11, %14, %cst_20 {dimension_numbers = #tpu.dot_dimension_numbers<[1], [1], [0], [0], [0, 0, 1, 0], [], []>} : vector<8x8xf32>, vector<8x8xf32>, vector<8x8xf32> -> vector<8x8xf32>
    %cst_21 = arith.constant dense<0xFF800000> : vector<8xf32>
    %19 = vector.multi_reduction <maximumf>, %18, %cst_21 [1] : vector<8x8xf32> to vector<8xf32>
    %20 = vector.shape_cast %19 : vector<8xf32> to vector<8x1xf32>
    %21 = vector.broadcast %20 : vector<8x1xf32> to vector<8x8xf32>
    %22 = arith.subf %18, %21 : vector<8x8xf32>
    %23 = math.exp %22 : vector<8x8xf32>
    %cst_22 = arith.constant dense<0.000000e+00> : vector<8xf32>
    %24 = vector.multi_reduction <add>, %23, %cst_22 [1] : vector<8x8xf32> to vector<8xf32>
    %25 = vector.shape_cast %24 : vector<8xf32> to vector<8x1xf32>
    %26 = tpu.reciprocal %25 {approx = true} : vector<8x1xf32> -> vector<8x1xf32>
    %27 = arith.mulf %25, %26 : vector<8x1xf32>
    %cst_23 = arith.constant 2.000000e+00 : f32
    %28 = vector.broadcast %cst_23 : f32 to vector<8x1xf32>
    %29 = arith.subf %28, %27 : vector<8x1xf32>
    %30 = arith.mulf %26, %29 : vector<8x1xf32>
    %31 = vector.broadcast %30 : vector<8x1xf32> to vector<8x8xf32>
    %32 = arith.mulf %23, %31 : vector<8x8xf32>
    %c0_24 = arith.constant 0 : index
    %c0_25 = arith.constant 0 : index
    %c0_26 = arith.constant 0 : index
    %c0_27 = arith.constant 0 : index
    %33 = vector.load %arg13[%c0_24, %c0_25, %c0_26, %c0_27] : memref<1x1x8x8xf32, #tpu.memory_space<vmem>>, vector<1x1x8x8xf32>
    %34 = vector.shape_cast %33 : vector<1x1x8x8xf32> to vector<8x8xf32>
    %35 = vector.shape_cast %32 : vector<8x8xf32> to vector<1x1x8x8xf32>
    tpu.vector_store %arg13[%c0_24, %c0_25, %c0_26, %c0_27], %35 {strides = array<i32>} : memref<1x1x8x8xf32, #tpu.memory_space<vmem>>, vector<1x1x8x8xf32>,
    %cst_28 = arith.constant dense<0.000000e+00> : vector<8x8xf32>
    %36 = tpu.matmul %32, %17, %cst_28 {dimension_numbers = #tpu.dot_dimension_numbers<[1], [0], [0], [1], [0, 0, 1, 1], [], []>} : vector<8x8xf32>, vector<8x8xf32>, vector<8x8xf32> -> vector<8x8xf32>
    %c0_29 = arith.constant 0 : index
    %c0_30 = arith.constant 0 : index
    %37 = vector.load %arg14[%c0_29, %c0_30] : memref<8x32xf32, #tpu.memory_space<vmem>>, vector<8x32xf32>
    %c0_31 = arith.constant 0 : index
    %c0_32 = arith.constant 0 : index
    %c0_33 = arith.constant 0 : index
    %38 = vector.load %arg8[%c0_31, %c0_32, %c0_33] : memref<1x8x32xf32, #tpu.memory_space<vmem>>, vector<1x8x32xf32>
    %39 = vector.shape_cast %38 : vector<1x8x32xf32> to vector<8x32xf32>
    %cst_34 = arith.constant dense<0.000000e+00> : vector<8x32xf32>
    %40 = tpu.matmul %36, %39, %cst_34 {dimension_numbers = #tpu.dot_dimension_numbers<[1], [0], [0], [1], [0, 0, 1, 1], [], []>} : vector<8x8xf32>, vector<8x32xf32>, vector<8x32xf32> -> vector<8x32xf32>
    %41 = arith.addf %37, %40 : vector<8x32xf32>
    %c0_35 = arith.constant 0 : index
    %c0_36 = arith.constant 0 : index
    %42 = vector.load %arg14[%c0_35, %c0_36] : memref<8x32xf32, #tpu.memory_space<vmem>>, vector<8x32xf32>
    tpu.vector_store %arg14[%c0_35, %c0_36], %41 {strides = array<i32>} : memref<8x32xf32, #tpu.memory_space<vmem>>, vector<8x32xf32>,
    %c3_i32 = arith.constant 3 : i32
    %43 = arith.cmpi eq, %arg1, %c3_i32 : i32
    %44 = arith.extui %43 : i1 to i32
    %c0_i32_37 = arith.constant 0 : i32
    %45 = arith.cmpi ne, %44, %c0_i32_37 : i32
    scf.if %45 {
      %c0_38 = arith.constant 0 : index
      %c0_39 = arith.constant 0 : index
      %46 = vector.load %arg14[%c0_38, %c0_39] : memref<8x32xf32, #tpu.memory_space<vmem>>, vector<8x32xf32>
      %c0_40 = arith.constant 0 : index
      %c0_41 = arith.constant 0 : index
      %47 = vector.load %arg9[%c0_40, %c0_41] : memref<1x32xf32, #tpu.memory_space<vmem>>, vector<1x32xf32>
      %48 = vector.broadcast %47 : vector<1x32xf32> to vector<8x32xf32>
      %49 = arith.addf %46, %48 : vector<8x32xf32>
      %50 = arith.addf %49, %1 : vector<8x32xf32>
      %cst_42 = arith.constant dense<0.000000e+00> : vector<8xf32>
      %51 = vector.multi_reduction <add>, %50, %cst_42 [1] : vector<8x32xf32> to vector<8xf32>
      %52 = vector.shape_cast %51 : vector<8xf32> to vector<8x1xf32>
      %cst_43 = arith.constant 3.200000e+01 : f32
      %53 = vector.broadcast %cst_43 : f32 to vector<8x1xf32>
      %54 = arith.divf %52, %53 : vector<8x1xf32>
      %55 = vector.broadcast %54 : vector<8x1xf32> to vector<8x32xf32>
      %56 = arith.subf %50, %55 : vector<8x32xf32>
      %57 = arith.mulf %56, %56 : vector<8x32xf32>
      %cst_44 = arith.constant dense<0.000000e+00> : vector<8xf32>
      %58 = vector.multi_reduction <add>, %57, %cst_44 [1] : vector<8x32xf32> to vector<8xf32>
      %59 = vector.shape_cast %58 : vector<8xf32> to vector<8x1xf32>
      %cst_45 = arith.constant 3.100000e+01 : f32
      %60 = vector.broadcast %cst_45 : f32 to vector<8x1xf32>
      %61 = arith.divf %59, %60 : vector<8x1xf32>
      %62 = vector.broadcast %54 : vector<8x1xf32> to vector<8x32xf32>
      %63 = arith.subf %50, %62 : vector<8x32xf32>
      %64 = math.sqrt %61 : vector<8x1xf32>
      %cst_46 = arith.constant 1.000000e-03 : f32
      %65 = vector.broadcast %cst_46 : f32 to vector<8x1xf32>
      %66 = arith.addf %64, %65 : vector<8x1xf32>
      %67 = vector.broadcast %66 : vector<8x1xf32> to vector<8x32xf32>
      %68 = arith.divf %63, %67 : vector<8x32xf32>
      %c0_47 = arith.constant 0 : index
      %c0_48 = arith.constant 0 : index
      %69 = vector.load %arg10[%c0_47, %c0_48] : memref<1x32xf32, #tpu.memory_space<vmem>>, vector<1x32xf32>
      %70 = vector.broadcast %69 : vector<1x32xf32> to vector<8x32xf32>
      %71 = arith.mulf %68, %70 : vector<8x32xf32>
      %c0_49 = arith.constant 0 : index
      %c0_50 = arith.constant 0 : index
      %72 = vector.load %arg11[%c0_49, %c0_50] : memref<1x32xf32, #tpu.memory_space<vmem>>, vector<1x32xf32>
      %73 = vector.broadcast %72 : vector<1x32xf32> to vector<8x32xf32>
      %74 = arith.addf %71, %73 : vector<8x32xf32>
      %c0_51 = arith.constant 0 : index
      %c0_52 = arith.constant 0 : index
      %c0_53 = arith.constant 0 : index
      %75 = vector.load %arg12[%c0_51, %c0_52, %c0_53] : memref<1x8x32xf32, #tpu.memory_space<vmem>>, vector<1x8x32xf32>
      %76 = vector.shape_cast %75 : vector<1x8x32xf32> to vector<8x32xf32>
      %77 = vector.shape_cast %74 : vector<8x32xf32> to vector<1x8x32xf32>
      tpu.vector_store %arg12[%c0_51, %c0_52, %c0_53], %77 {strides = array<i32>} : memref<1x8x32xf32, #tpu.memory_space<vmem>>, vector<1x8x32xf32>,
    } else {
    }
    return
  }
  func.func @transform_0(%arg0: i32, %arg1: i32) -> (i32, i32, i32) {
    %c0_i32 = arith.constant 0 : i32
    %c0_i32_0 = arith.constant 0 : i32
    %c0_i32_1 = arith.constant 0 : i32
    return %arg0, %c0_i32, %c0_i32_0 : i32, i32, i32
  }
  func.func @transform_1(%arg0: i32, %arg1: i32) -> (i32, i32, i32) {
    %c0_i32 = arith.constant 0 : i32
    %c0_i32_0 = arith.constant 0 : i32
    %c0_i32_1 = arith.constant 0 : i32
    return %arg0, %c0_i32, %c0_i32_0 : i32, i32, i32
  }
  func.func @transform_2(%arg0: i32, %arg1: i32) -> (i32, i32, i32) {
    %c0_i32 = arith.constant 0 : i32
    %c0_i32_0 = arith.constant 0 : i32
    %c0_i32_1 = arith.constant 0 : i32
    return %arg0, %c0_i32, %c0_i32_0 : i32, i32, i32
  }
  func.func @transform_3(%arg0: i32, %arg1: i32) -> (i32, i32, i32) {
    %c0_i32 = arith.constant 0 : i32
    %c0_i32_0 = arith.constant 0 : i32
    %c0_i32_1 = arith.constant 0 : i32
    return %arg1, %c0_i32, %c0_i32_0 : i32, i32, i32
  }
  func.func @transform_4(%arg0: i32, %arg1: i32) -> (i32, i32, i32) {
    %c0_i32 = arith.constant 0 : i32
    %c0_i32_0 = arith.constant 0 : i32
    %c0_i32_1 = arith.constant 0 : i32
    return %arg1, %c0_i32, %c0_i32_0 : i32, i32, i32
  }
  func.func @transform_5(%arg0: i32, %arg1: i32) -> (i32, i32, i32) {
    %c0_i32 = arith.constant 0 : i32
    %c0_i32_0 = arith.constant 0 : i32
    %c0_i32_1 = arith.constant 0 : i32
    return %arg1, %c0_i32, %c0_i32_0 : i32, i32, i32
  }
  func.func @transform_6(%arg0: i32, %arg1: i32) -> (i32, i32, i32) {
    %c0_i32 = arith.constant 0 : i32
    %c0_i32_0 = arith.constant 0 : i32
    %c0_i32_1 = arith.constant 0 : i32
    return %arg1, %c0_i32, %c0_i32_0 : i32, i32, i32
  }
  func.func @transform_7(%arg0: i32, %arg1: i32) -> (i32, i32) {
    %c0_i32 = arith.constant 0 : i32
    %c0_i32_0 = arith.constant 0 : i32
    %c0_i32_1 = arith.constant 0 : i32
    return %c0_i32, %c0_i32_0 : i32, i32
  }
  func.func @transform_8(%arg0: i32, %arg1: i32) -> (i32, i32) {
    %c0_i32 = arith.constant 0 : i32
    %c0_i32_0 = arith.constant 0 : i32
    %c0_i32_1 = arith.constant 0 : i32
    return %c0_i32, %c0_i32_0 : i32, i32
  }
  func.func @transform_9(%arg0: i32, %arg1: i32) -> (i32, i32) {
    %c0_i32 = arith.constant 0 : i32
    %c0_i32_0 = arith.constant 0 : i32
    %c0_i32_1 = arith.constant 0 : i32
    return %c0_i32, %c0_i32_0 : i32, i32
  }
  func.func @transform_10(%arg0: i32, %arg1: i32) -> (i32, i32, i32) {
    %c0_i32 = arith.constant 0 : i32
    %c0_i32_0 = arith.constant 0 : i32
    %c0_i32_1 = arith.constant 0 : i32
    return %arg0, %c0_i32, %c0_i32_0 : i32, i32, i32
  }
  func.func @transform_11(%arg0: i32, %arg1: i32) -> (i32, i32, i32, i32) {
    %c0_i32 = arith.constant 0 : i32
    %c0_i32_0 = arith.constant 0 : i32
    %c0_i32_1 = arith.constant 0 : i32
    return %arg1, %arg0, %c0_i32, %c0_i32_0 : i32, i32, i32, i32
  }
}

</mosaic_0001>

<llo_original>
// kernel: tpu_custom_call.1
$region0: #{tpu_custom_call.1}
  #allocation0 [shape = 'u32[]', space=smem, size = 0x4, offset = 0x4, fixed_abs, tag = 'smem constant byte address 0x4 - core index']
  #allocation1 [shape = 'u32[144,128]{1,0:T(1,128)}', space=vmem, size = 0x12000, scoped, tag = 'internal scratch']
  #allocation2 [shape = 'f32[8,32]{1,0:T(8,128)}', space=vmem, size = 0x1000, scoped, tag = 'scratch operand']
  %s0 = inlined_call_operand.vmem [shape: f32[2,8,32], index: 0, kind: input, shape index: {}]
  %s1 = inlined_call_operand.vmem [shape: f32[2,8,32], index: 1, kind: input, shape index: {}]
  %s2 = inlined_call_operand.vmem [shape: f32[2,8,32], index: 2, kind: input, shape index: {}]
  %s3 = inlined_call_operand.vmem [shape: f32[4,32,8], index: 3, kind: input, shape index: {}]
  %s4 = inlined_call_operand.vmem [shape: f32[4,32,8], index: 4, kind: input, shape index: {}]
  %s5 = inlined_call_operand.vmem [shape: f32[4,32,8], index: 5, kind: input, shape index: {}]
  %s6 = inlined_call_operand.vmem [shape: f32[4,8,32], index: 6, kind: input, shape index: {}]
  %s7 = inlined_call_operand.vmem [shape: f32[1,32], index: 7, kind: input, shape index: {}]
  %s8 = inlined_call_operand.vmem [shape: f32[1,32], index: 8, kind: input, shape index: {}]
  %s9 = inlined_call_operand.vmem [shape: f32[1,32], index: 9, kind: input, shape index: {}]
  %s10 = inlined_call_operand.hbm [shape: f32[2,8,32], index: 10, kind: output, shape index: {0}]
  %s11 = inlined_call_operand.hbm [shape: f32[4,2,8,8], index: 11, kind: output, shape index: {1}]
  %12 = xla_tuple %s10, %s11
  %s13 = sld [smem:[#allocation0]]
  $region89: #{tpu_custom_call.1} parent=0
    _
  %s15 = ssub.s32 1, %s13
  %s16 = scalar_select 0, %s15, %s13
  $region1: #{tpu_custom_call.1} parent=0
    #allocation3 [shape = 'u8[8192]{0}', space=vmem, size = 0x2000, scoped, tag = 'output window, operand 0']
    #allocation4 [shape = 's32[2]{0}', space=sflag, size = 0x8, scoped, tag = 'scoped memory for tpu_custom_call.1']
    #allocation5 [shape = 'u8[8192]{0}', space=vmem, size = 0x2000, scoped, tag = 'output window, operand 1']
    #allocation6 [shape = 's32[2]{0}', space=sflag, size = 0x8, scoped, tag = 'scoped memory for tpu_custom_call.1']
    %17 = vsyncpa [#allocation4], 0
    %s18 = scalar_lea.sflag [#allocation4], 1
    %19 = vsyncpa %s18, 0
    %20 = vsyncpa [#allocation6], 0
    %s21 = scalar_lea.sflag [#allocation6], 1
    %22 = vsyncpa %s21, 0
    loop: start=0, step=1, limit=10
    $region2: #{tpu_custom_call.1} parent=1 // loop_pre_header
      _
    $region3: #{tpu_custom_call.1} parent=1 // loop_header
      %s24 = sphi 0, %s28
      %p25 = scmp.ge.s32.totalorder %s24, 10
      %s31 = sphi 0, %s43
      %s32 = sphi 0, %s39
      %s33 = sphi 0, %s31
      %s34 = sphi 0, %s32
      %s35 = sphi 0, %s33
      %s36 = sphi 0, %s34
      %s46 = sphi 0, %s48
      %s49 = sphi 0, %s46
      %s50 = sphi 0, %s49
      %s66 = sphi 0, %s50
      %s72 = sphi 0, %s74
      %s75 = sphi 0, %s72
      %s76 = sphi 0, %s75
      %s92 = sphi 0, %s76
      %s98 = sphi 0, %s100
      %s101 = sphi 0, %s98
      %s102 = sphi 0, %s101
      %s118 = sphi 0, %s102
      %s124 = sphi 0, %s126
      %s127 = sphi 0, %s124
      %s128 = sphi 0, %s127
      %s144 = sphi 0, %s128
      %s150 = sphi 0, %s152
      %s153 = sphi 0, %s150
      %s154 = sphi 0, %s153
      %s170 = sphi 0, %s154
      %s176 = sphi 0, %s178
      %s179 = sphi 0, %s176
      %s180 = sphi 0, %s179
      %s196 = sphi 0, %s180
      %s202 = sphi 0, %s204
      %s205 = sphi 0, %s202
      %s206 = sphi 0, %s205
      %s222 = sphi 0, %s206
      %s226 = sphi 0, %s226
      %s228 = sphi 0, %s226
      %s229 = sphi 0, %s228
      %s243 = sphi 0, %s229
      %s247 = sphi 0, %s247
      %s249 = sphi 0, %s247
      %s250 = sphi 0, %s249
      %s264 = sphi 0, %s250
      %s268 = sphi 0, %s268
      %s270 = sphi 0, %s268
      %s271 = sphi 0, %s270
      %s285 = sphi 0, %s271
      %s291 = sphi 0, %s293
      %s294 = sphi 0, %s291
      %s295 = sphi 0, %s294
      %s311 = sphi 0, %s295
      %s319 = sphi 0, %s321
      %s322 = sphi 0, %s319
      %s323 = sphi 0, %s322
      %s339 = sphi 0, %s323
    $region4: #{tpu_custom_call.1} parent=1 // loop_header_branch
      %27 = sbr.rel (%p25) target = $region8
    $region5: #{tpu_custom_call.1} parent=1 // loop_body
      %s29 = ssub.s32 %s24, 1
      %s30 = ssub.s32 %s24, 2
      %s37 = sadd.s32 1, %s32
      %p38 = scmp.ge.s32.totalorder %s37, 4
      %s39 = scalar_select %p38, 0, %s37
      %s40 = sadd.s32 1, %s31
      %s41 = scalar_select %p38, %s40, %s31
      %p42 = scmp.ge.s32.totalorder %s41, 2
      %s43 = scalar_select %p42, 0, %s41
      %s44 = ssub.s32 %s31, %s43
      %p45 = scmp.eq.s32.totalorder %s44, 0
      %s47 = sadd.s32 %s46, 1
      %s48 = scalar_select %p45, %s46, %s47
      %p51 = pneg %p45
      %p52 = scmp.eq.s32.totalorder %s24, 7
      %p53 = por %p51, %p52
      %p54 = scmp.ne.s32.totalorder %s46, %s49
      %p55 = scmp.eq.s32.totalorder %s24, 0
      %p56 = por %p54, %p55
      %p57 = scmp.ne.s32.totalorder %s46, %s49
      %p58 = scmp.eq.s32.totalorder %s29, 7
      %p59 = por %p57, %p58
      %p60 = scmp.ne.s32.totalorder %s49, %s50
      %p61 = scmp.eq.s32.totalorder %s29, 0
      %p62 = por %p60, %p61
      %p63 = scmp.ne.s32.totalorder %s49, %s50
      %p64 = scmp.eq.s32.totalorder %s30, 7
      %p65 = por %p63, %p64
      %p67 = scmp.ne.s32.totalorder %s50, %s66
      %p68 = scmp.eq.s32.totalorder %s30, 0
      %p69 = por %p67, %p68
      %s70 = ssub.s32 %s31, %s43
      %p71 = scmp.eq.s32.totalorder %s70, 0
      %s73 = sadd.s32 %s72, 1
      %s74 = scalar_select %p71, %s72, %s73
      %p77 = pneg %p71
      %p78 = scmp.eq.s32.totalorder %s24, 7
      %p79 = por %p77, %p78
      %p80 = scmp.ne.s32.totalorder %s72, %s75
      %p81 = scmp.eq.s32.totalorder %s24, 0
      %p82 = por %p80, %p81
      %p83 = scmp.ne.s32.totalorder %s72, %s75
      %p84 = scmp.eq.s32.totalorder %s29, 7
      %p85 = por %p83, %p84
      %p86 = scmp.ne.s32.totalorder %s75, %s76
      %p87 = scmp.eq.s32.totalorder %s29, 0
      %p88 = por %p86, %p87
      %p89 = scmp.ne.s32.totalorder %s75, %s76
      %p90 = scmp.eq.s32.totalorder %s30, 7
      %p91 = por %p89, %p90
      %p93 = scmp.ne.s32.totalorder %s76, %s92
      %p94 = scmp.eq.s32.totalorder %s30, 0
      %p95 = por %p93, %p94
      %s96 = ssub.s32 %s31, %s43
      %p97 = scmp.eq.s32.totalorder %s96, 0
      %s99 = sadd.s32 %s98, 1
      %s100 = scalar_select %p97, %s98, %s99
      %p103 = pneg %p97
      %p104 = scmp.eq.s32.totalorder %s24, 7
      %p105 = por %p103, %p104
      %p106 = scmp.ne.s32.totalorder %s98, %s101
      %p107 = scmp.eq.s32.totalorder %s24, 0
      %p108 = por %p106, %p107
      %p109 = scmp.ne.s32.totalorder %s98, %s101
      %p110 = scmp.eq.s32.totalorder %s29, 7
      %p111 = por %p109, %p110
      %p112 = scmp.ne.s32.totalorder %s101, %s102
      %p113 = scmp.eq.s32.totalorder %s29, 0
      %p114 = por %p112, %p113
      %p115 = scmp.ne.s32.totalorder %s101, %s102
      %p116 = scmp.eq.s32.totalorder %s30, 7
      %p117 = por %p115, %p116
      %p119 = scmp.ne.s32.totalorder %s102, %s118
      %p120 = scmp.eq.s32.totalorder %s30, 0
      %p121 = por %p119, %p120
      %s122 = ssub.s32 %s32, %s39
      %p123 = scmp.eq.s32.totalorder %s122, 0
      %s125 = sadd.s32 %s124, 1
      %s126 = scalar_select %p123, %s124, %s125
      %p129 = pneg %p123
      %p130 = scmp.eq.s32.totalorder %s24, 7
      %p131 = por %p129, %p130
      %p132 = scmp.ne.s32.totalorder %s124, %s127
      %p133 = scmp.eq.s32.totalorder %s24, 0
      %p134 = por %p132, %p133
      %p135 = scmp.ne.s32.totalorder %s124, %s127
      %p136 = scmp.eq.s32.totalorder %s29, 7
      %p137 = por %p135, %p136
      %p138 = scmp.ne.s32.totalorder %s127, %s128
      %p139 = scmp.eq.s32.totalorder %s29, 0
      %p140 = por %p138, %p139
      %p141 = scmp.ne.s32.totalorder %s127, %s128
      %p142 = scmp.eq.s32.totalorder %s30, 7
      %p143 = por %p141, %p142
      %p145 = scmp.ne.s32.totalorder %s128, %s144
      %p146 = scmp.eq.s32.totalorder %s30, 0
      %p147 = por %p145, %p146
      %s148 = ssub.s32 %s32, %s39
      %p149 = scmp.eq.s32.totalorder %s148, 0
      %s151 = sadd.s32 %s150, 1
      %s152 = scalar_select %p149, %s150, %s151
      %p155 = pneg %p149
      %p156 = scmp.eq.s32.totalorder %s24, 7
      %p157 = por %p155, %p156
      %p158 = scmp.ne.s32.totalorder %s150, %s153
      %p159 = scmp.eq.s32.totalorder %s24, 0
      %p160 = por %p158, %p159
      %p161 = scmp.ne.s32.totalorder %s150, %s153
      %p162 = scmp.eq.s32.totalorder %s29, 7
      %p163 = por %p161, %p162
      %p164 = scmp.ne.s32.totalorder %s153, %s154
      %p165 = scmp.eq.s32.totalorder %s29, 0
      %p166 = por %p164, %p165
      %p167 = scmp.ne.s32.totalorder %s153, %s154
      %p168 = scmp.eq.s32.totalorder %s30, 7
      %p169 = por %p167, %p168
      %p171 = scmp.ne.s32.totalorder %s154, %s170
      %p172 = scmp.eq.s32.totalorder %s30, 0
      %p173 = por %p171, %p172
      %s174 = ssub.s32 %s32, %s39
      %p175 = scmp.eq.s32.totalorder %s174, 0
      %s177 = sadd.s32 %s176, 1
      %s178 = scalar_select %p175, %s176, %s177
      %p181 = pneg %p175
      %p182 = scmp.eq.s32.totalorder %s24, 7
      %p183 = por %p181, %p182
      %p184 = scmp.ne.s32.totalorder %s176, %s179
      %p185 = scmp.eq.s32.totalorder %s24, 0
      %p186 = por %p184, %p185
      %p187 = scmp.ne.s32.totalorder %s176, %s179
      %p188 = scmp.eq.s32.totalorder %s29, 7
      %p189 = por %p187, %p188
      %p190 = scmp.ne.s32.totalorder %s179, %s180
      %p191 = scmp.eq.s32.totalorder %s29, 0
      %p192 = por %p190, %p191
      %p193 = scmp.ne.s32.totalorder %s179, %s180
      %p194 = scmp.eq.s32.totalorder %s30, 7
      %p195 = por %p193, %p194
      %p197 = scmp.ne.s32.totalorder %s180, %s196
      %p198 = scmp.eq.s32.totalorder %s30, 0
      %p199 = por %p197, %p198
      %s200 = ssub.s32 %s32, %s39
      %p201 = scmp.eq.s32.totalorder %s200, 0
      %s203 = sadd.s32 %s202, 1
      %s204 = scalar_select %p201, %s202, %s203
      %p207 = pneg %p201
      %p208 = scmp.eq.s32.totalorder %s24, 7
      %p209 = por %p207, %p208
      %p210 = scmp.ne.s32.totalorder %s202, %s205
      %p211 = scmp.eq.s32.totalorder %s24, 0
      %p212 = por %p210, %p211
      %p213 = scmp.ne.s32.totalorder %s202, %s205
      %p214 = scmp.eq.s32.totalorder %s29, 7
      %p215 = por %p213, %p214
      %p216 = scmp.ne.s32.totalorder %s205, %s206
      %p217 = scmp.eq.s32.totalorder %s29, 0
      %p218 = por %p216, %p217
      %p219 = scmp.ne.s32.totalorder %s205, %s206
      %p220 = scmp.eq.s32.totalorder %s30, 7
      %p221 = por %p219, %p220
      %p223 = scmp.ne.s32.totalorder %s206, %s222
      %p224 = scmp.eq.s32.totalorder %s30, 0
      %p225 = por %p223, %p224
      %s227 = sadd.s32 %s226, 1
      %p230 = scmp.eq.s32.totalorder %s24, 7
      %p231 = scmp.ne.s32.totalorder %s226, %s228
      %p232 = scmp.eq.s32.totalorder %s24, 0
      %p233 = por %p231, %p232
      %p234 = scmp.ne.s32.totalorder %s226, %s228
      %p235 = scmp.eq.s32.totalorder %s29, 7
      %p236 = por %p234, %p235
      %p237 = scmp.ne.s32.totalorder %s228, %s229
      %p238 = scmp.eq.s32.totalorder %s29, 0
      %p239 = por %p237, %p238
      %p240 = scmp.ne.s32.totalorder %s228, %s229
      %p241 = scmp.eq.s32.totalorder %s30, 7
      %p242 = por %p240, %p241
      %p244 = scmp.ne.s32.totalorder %s229, %s243
      %p245 = scmp.eq.s32.totalorder %s30, 0
      %p246 = por %p244, %p245
      %s248 = sadd.s32 %s247, 1
      %p251 = scmp.eq.s32.totalorder %s24, 7
      %p252 = scmp.ne.s32.totalorder %s247, %s249
      %p253 = scmp.eq.s32.totalorder %s24, 0
      %p254 = por %p252, %p253
      %p255 = scmp.ne.s32.totalorder %s247, %s249
      %p256 = scmp.eq.s32.totalorder %s29, 7
      %p257 = por %p255, %p256
      %p258 = scmp.ne.s32.totalorder %s249, %s250
      %p259 = scmp.eq.s32.totalorder %s29, 0
      %p260 = por %p258, %p259
      %p261 = scmp.ne.s32.totalorder %s249, %s250
      %p262 = scmp.eq.s32.totalorder %s30, 7
      %p263 = por %p261, %p262
      %p265 = scmp.ne.s32.totalorder %s250, %s264
      %p266 = scmp.eq.s32.totalorder %s30, 0
      %p267 = por %p265, %p266
      %s269 = sadd.s32 %s268, 1
      %p272 = scmp.eq.s32.totalorder %s24, 7
      %p273 = scmp.ne.s32.totalorder %s268, %s270
      %p274 = scmp.eq.s32.totalorder %s24, 0
      %p275 = por %p273, %p274
      %p276 = scmp.ne.s32.totalorder %s268, %s270
      %p277 = scmp.eq.s32.totalorder %s29, 7
      %p278 = por %p276, %p277
      %p279 = scmp.ne.s32.totalorder %s270, %s271
      %p280 = scmp.eq.s32.totalorder %s29, 0
      %p281 = por %p279, %p280
      %p282 = scmp.ne.s32.totalorder %s270, %s271
      %p283 = scmp.eq.s32.totalorder %s30, 7
      %p284 = por %p282, %p283
      %p286 = scmp.ne.s32.totalorder %s271, %s285
      %p287 = scmp.eq.s32.totalorder %s30, 0
      %p288 = por %p286, %p287
      %s289 = ssub.s32 %s31, %s43
      %p290 = scmp.eq.s32.totalorder %s289, 0
      %s292 = sadd.s32 %s291, 1
      %s293 = scalar_select %p290, %s291, %s292
      %p296 = pneg %p290
      %p297 = scmp.eq.s32.totalorder %s24, 7
      %p298 = por %p296, %p297
      %p299 = scmp.ne.s32.totalorder %s291, %s294
      %p300 = scmp.eq.s32.totalorder %s24, 0
      %p301 = por %p299, %p300
      %p302 = scmp.ne.s32.totalorder %s291, %s294
      %p303 = scmp.eq.s32.totalorder %s29, 7
      %p304 = por %p302, %p303
      %p305 = scmp.ne.s32.totalorder %s294, %s295
      %p306 = scmp.eq.s32.totalorder %s29, 0
      %p307 = por %p305, %p306
      %p308 = scmp.ne.s32.totalorder %s294, %s295
      %p309 = scmp.eq.s32.totalorder %s30, 7
      %p310 = por %p308, %p309
      %p312 = scmp.ne.s32.totalorder %s295, %s311
      %p313 = scmp.eq.s32.totalorder %s30, 0
      %p314 = por %p312, %p313
      %s315 = ssub.s32 %s32, %s39
      %s316 = ssub.s32 %s31, %s43
      %s317 = sor.u32 %s315, %s316
      %p318 = scmp.eq.s32.totalorder %s317, 0
      %s320 = sadd.s32 %s319, 1
      %s321 = scalar_select %p318, %s319, %s320
      %p324 = pneg %p318
      %p325 = scmp.eq.s32.totalorder %s24, 7
      %p326 = por %p324, %p325
      %p327 = scmp.ne.s32.totalorder %s319, %s322
      %p328 = scmp.eq.s32.totalorder %s24, 0
      %p329 = por %p327, %p328
      %p330 = scmp.ne.s32.totalorder %s319, %s322
      %p331 = scmp.eq.s32.totalorder %s29, 7
      %p332 = por %p330, %p331
      %p333 = scmp.ne.s32.totalorder %s322, %s323
      %p334 = scmp.eq.s32.totalorder %s29, 0
      %p335 = por %p333, %p334
      %p336 = scmp.ne.s32.totalorder %s322, %s323
      %p337 = scmp.eq.s32.totalorder %s30, 7
      %p338 = por %p336, %p337
      %p340 = scmp.ne.s32.totalorder %s323, %s339
      %p341 = scmp.eq.s32.totalorder %s30, 0
      %p342 = por %p340, %p341
      %p343 = scmp.le.s32.totalorder 1, %s24
      %p344 = scmp.lt.s32.totalorder %s24, 9
      %p345 = pnand %p343, %p344
      %p346 = pneg %p345
      // Predicated region
      $region9: #{tpu_custom_call.1} parent=5 // pred_check
        _
      $region10: #{tpu_custom_call.1} parent=5 // pred_check_branch
        %348 = sbr.rel (%p345) target = $region12
      $region11: #{tpu_custom_call.1} parent=5 // pred_region
        %s349 = ssub.s32 %s24, 1
        // Predicated region
        $region13: #{tpu_custom_call.1} parent=11 // pred_check
          %p350 = pneg %p239
        $region14: #{tpu_custom_call.1} parent=11 // pred_check_branch
          %352 = sbr.rel (%p350) target = $region16
        $region15: #{tpu_custom_call.1} parent=11 // pred_region
          _
        $region16: #{tpu_custom_call.1} parent=11 // pred_fallthru
          _
        // Predicated region
        $region17: #{tpu_custom_call.1} parent=11 // pred_check
          %p353 = pneg %p260
        $region18: #{tpu_custom_call.1} parent=11 // pred_check_branch
          %355 = sbr.rel (%p353) target = $region20
        $region19: #{tpu_custom_call.1} parent=11 // pred_region
          _
        $region20: #{tpu_custom_call.1} parent=11 // pred_fallthru
          _
        // Predicated region
        $region21: #{tpu_custom_call.1} parent=11 // pred_check
          %p356 = pneg %p281
        $region22: #{tpu_custom_call.1} parent=11 // pred_check_branch
          %358 = sbr.rel (%p356) target = $region24
        $region23: #{tpu_custom_call.1} parent=11 // pred_region
          _
        $region24: #{tpu_custom_call.1} parent=11 // pred_fallthru
          _
      $region12: #{tpu_custom_call.1} parent=5 // pred_fallthru
        _
      %p359 = scmp.lt.s32.totalorder %s24, 8
      // Predicated region
      $region25: #{tpu_custom_call.1} parent=5 // pred_check
        %p360 = pneg %p359
      $region26: #{tpu_custom_call.1} parent=5 // pred_check_branch
        %362 = sbr.rel (%p360) target = $region28
      $region27: #{tpu_custom_call.1} parent=5 // pred_region
        // Predicated region
        $region29: #{tpu_custom_call.1} parent=27 // pred_check
          %p363 = pneg %p56
        $region30: #{tpu_custom_call.1} parent=27 // pred_check_branch
          %365 = sbr.rel (%p363) target = $region32
        $region31: #{tpu_custom_call.1} parent=27 // pred_region
          %p366 = scmp.lt.s32.totalorder %s31, 1
          %s367 = scalar_select %p366, %s31, 1
          %s368 = smul.addr %s367, 8
          %s369 = scalar_lea.vmem %s0, %s368
        $region32: #{tpu_custom_call.1} parent=27 // pred_fallthru
          _
        // Predicated region
        $region33: #{tpu_custom_call.1} parent=27 // pred_check
          %p370 = pneg %p82
        $region34: #{tpu_custom_call.1} parent=27 // pred_check_branch
          %372 = sbr.rel (%p370) target = $region36
        $region35: #{tpu_custom_call.1} parent=27 // pred_region
          %p373 = scmp.lt.s32.totalorder %s31, 1
          %s374 = scalar_select %p373, %s31, 1
          %s375 = smul.addr %s374, 8
          %s376 = scalar_lea.vmem %s1, %s375
        $region36: #{tpu_custom_call.1} parent=27 // pred_fallthru
          _
        // Predicated region
        $region37: #{tpu_custom_call.1} parent=27 // pred_check
          %p377 = pneg %p108
        $region38: #{tpu_custom_call.1} parent=27 // pred_check_branch
          %379 = sbr.rel (%p377) target = $region40
        $region39: #{tpu_custom_call.1} parent=27 // pred_region
          %p380 = scmp.lt.s32.totalorder %s31, 1
          %s381 = scalar_select %p380, %s31, 1
          %s382 = smul.addr %s381, 8
          %s383 = scalar_lea.vmem %s2, %s382
        $region40: #{tpu_custom_call.1} parent=27 // pred_fallthru
          _
        // Predicated region
        $region41: #{tpu_custom_call.1} parent=27 // pred_check
          %p384 = pneg %p134
        $region42: #{tpu_custom_call.1} parent=27 // pred_check_branch
          %386 = sbr.rel (%p384) target = $region44
        $region43: #{tpu_custom_call.1} parent=27 // pred_region
          %p387 = scmp.lt.s32.totalorder %s32, 3
          %s388 = scalar_select %p387, %s32, 3
          %s389 = smul.addr %s388, 4
          %s390 = smul.addr %s389, 8
          %s391 = scalar_lea.vmem %s3, %s390
        $region44: #{tpu_custom_call.1} parent=27 // pred_fallthru
          _
        // Predicated region
        $region45: #{tpu_custom_call.1} parent=27 // pred_check
          %p392 = pneg %p160
        $region46: #{tpu_custom_call.1} parent=27 // pred_check_branch
          %394 = sbr.rel (%p392) target = $region48
        $region47: #{tpu_custom_call.1} parent=27 // pred_region
          %p395 = scmp.lt.s32.totalorder %s32, 3
          %s396 = scalar_select %p395, %s32, 3
          %s397 = smul.addr %s396, 4
          %s398 = smul.addr %s397, 8
          %s399 = scalar_lea.vmem %s4, %s398
        $region48: #{tpu_custom_call.1} parent=27 // pred_fallthru
          _
        // Predicated region
        $region49: #{tpu_custom_call.1} parent=27 // pred_check
          %p400 = pneg %p186
        $region50: #{tpu_custom_call.1} parent=27 // pred_check_branch
          %402 = sbr.rel (%p400) target = $region52
        $region51: #{tpu_custom_call.1} parent=27 // pred_region
          %p403 = scmp.lt.s32.totalorder %s32, 3
          %s404 = scalar_select %p403, %s32, 3
          %s405 = smul.addr %s404, 4
          %s406 = smul.addr %s405, 8
          %s407 = scalar_lea.vmem %s5, %s406
        $region52: #{tpu_custom_call.1} parent=27 // pred_fallthru
          _
        // Predicated region
        $region53: #{tpu_custom_call.1} parent=27 // pred_check
          %p408 = pneg %p212
        $region54: #{tpu_custom_call.1} parent=27 // pred_check_branch
          %410 = sbr.rel (%p408) target = $region56
        $region55: #{tpu_custom_call.1} parent=27 // pred_region
          %p411 = scmp.lt.s32.totalorder %s32, 3
          %s412 = scalar_select %p411, %s32, 3
          %s413 = smul.addr %s412, 8
          %s414 = scalar_lea.vmem %s6, %s413
        $region56: #{tpu_custom_call.1} parent=27 // pred_fallthru
          _
      $region28: #{tpu_custom_call.1} parent=5 // pred_fallthru
        _
      %p415 = scmp.le.s32.totalorder 1, %s24
      %p416 = scmp.lt.s32.totalorder %s24, 9
      %p417 = pnand %p415, %p416
      %p418 = pneg %p417
      // Predicated region
      $region57: #{tpu_custom_call.1} parent=5 // pred_check
        _
      $region58: #{tpu_custom_call.1} parent=5 // pred_check_branch
        %420 = sbr.rel (%p417) target = $region60
      $region59: #{tpu_custom_call.1} parent=5 // pred_region
        %s421 = ssub.s32 %s24, 1
        %p422 = scmp.lt.s32.totalorder %s33, 1
        %s423 = scalar_select %p422, %s33, 1
        %s424 = smul.addr %s423, 8
        %s425 = scalar_lea.vmem %s0, %s424
        %p426 = pneg %p62
        %p427 = pneg %p59
        %p428 = scmp.lt.s32.totalorder %s33, 1
        %s429 = scalar_select %p428, %s33, 1
        %s430 = smul.addr %s429, 8
        %s431 = scalar_lea.vmem %s1, %s430
        %p432 = pneg %p88
        %p433 = pneg %p85
        %p434 = scmp.lt.s32.totalorder %s33, 1
        %s435 = scalar_select %p434, %s33, 1
        %s436 = smul.addr %s435, 8
        %s437 = scalar_lea.vmem %s2, %s436
        %p438 = pneg %p114
        %p439 = pneg %p111
        %p440 = scmp.lt.s32.totalorder %s34, 3
        %s441 = scalar_select %p440, %s34, 3
        %s442 = smul.addr %s441, 4
        %s443 = smul.addr %s442, 8
        %s444 = scalar_lea.vmem %s3, %s443
        %p445 = pneg %p140
        %p446 = pneg %p137
        %p447 = scmp.lt.s32.totalorder %s34, 3
        %s448 = scalar_select %p447, %s34, 3
        %s449 = smul.addr %s448, 4
        %s450 = smul.addr %s449, 8
        %s451 = scalar_lea.vmem %s4, %s450
        %p452 = pneg %p166
        %p453 = pneg %p163
        %p454 = scmp.lt.s32.totalorder %s34, 3
        %s455 = scalar_select %p454, %s34, 3
        %s456 = smul.addr %s455, 4
        %s457 = smul.addr %s456, 8
        %s458 = scalar_lea.vmem %s5, %s457
        %p459 = pneg %p192
        %p460 = pneg %p189
        %p461 = scmp.lt.s32.totalorder %s34, 3
        %s462 = scalar_select %p461, %s34, 3
        %s463 = smul.addr %s462, 8
        %s464 = scalar_lea.vmem %s6, %s463
        %p465 = pneg %p218
        %p466 = pneg %p215
        %p467 = pneg %p239
        %p468 = pneg %p236
        %p469 = pneg %p260
        %p470 = pneg %p257
        %p471 = pneg %p281
        %p472 = pneg %p278
        %p473 = pneg %p307
        %p474 = pneg %p304
        %s475 = sand.u32 %s294, 1
        %s476 = scalar_lea.sflag [#allocation4], %s475
        %s477 = sand.u32 %s294, 1
        %s478 = smul.addr %s477, 8
        %s479 = scalar_lea.vmem [#allocation3], %s478
        %p480 = pneg %p335
        %p481 = pneg %p332
        %s482 = sand.u32 %s322, 1
        %s483 = scalar_lea.sflag [#allocation6], %s482
        %s484 = sand.u32 %s322, 1
        %s485 = smul.addr %s484, 8
        %s486 = scalar_lea.vmem [#allocation5], %s485
        %p487 = scmp.lt.s32.totalorder %s33, 1
        %s488 = scalar_select %p487, %s33, 1
        %s489 = smul.addr %s488, 8
        %s490 = scalar_lea.vmem %s0, %s489
        %p491 = scmp.lt.s32.totalorder %s33, 1
        %s492 = scalar_select %p491, %s33, 1
        %s493 = smul.addr %s492, 8
        %s494 = scalar_lea.vmem %s1, %s493
        %p495 = scmp.lt.s32.totalorder %s33, 1
        %s496 = scalar_select %p495, %s33, 1
        %s497 = smul.addr %s496, 8
        %s498 = scalar_lea.vmem %s2, %s497
        %p499 = scmp.lt.s32.totalorder %s34, 3
        %s500 = scalar_select %p499, %s34, 3
        %s501 = smul.addr %s500, 4
        %s502 = smul.addr %s501, 8
        %s503 = scalar_lea.vmem %s3, %s502
        %p504 = scmp.lt.s32.totalorder %s34, 3
        %s505 = scalar_select %p504, %s34, 3
        %s506 = smul.addr %s505, 4
        %s507 = smul.addr %s506, 8
        %s508 = scalar_lea.vmem %s4, %s507
        %p509 = scmp.lt.s32.totalorder %s34, 3
        %s510 = scalar_select %p509, %s34, 3
        %s511 = smul.addr %s510, 4
        %s512 = smul.addr %s511, 8
        %s513 = scalar_lea.vmem %s5, %s512
        %p514 = scmp.lt.s32.totalorder %s34, 3
        %s515 = scalar_select %p514, %s34, 3
        %s516 = smul.addr %s515, 8
        %s517 = scalar_lea.vmem %s6, %s516
        %v518 = vld [vmem:[%s490] sm:$0xff]
        %v519 = vld [vmem:[%s494] sm:$0xff]
        %v520 = vld [vmem:[%s498] sm:$0xff]
        %p521 = scmp.eq.s32.totalorder %s34, 0
        // Predicated region
        $region61: #{tpu_custom_call.1} parent=59 // pred_check
          %p522 = pneg %p521
        $region62: #{tpu_custom_call.1} parent=59 // pred_check_branch
          %524 = sbr.rel (%p522) target = $region64
        $region63: #{tpu_custom_call.1} parent=59 // pred_region
          %vm525 = vcmask 261120
          %526 = vst.msk [vmem:[#allocation2] sm:$0xff] %vm525, 0.0
        $region64: #{tpu_custom_call.1} parent=59 // pred_fallthru
          _
        %v527 = vld [vmem:[%s503] sm:$0xff]
        %v528 = vld [vmem:[%s503 + $0x8] sm:$0xff]
        %v529 = vld [vmem:[%s503 + $0x10] sm:$0xff]
        %v530 = vld [vmem:[%s503 + $0x18] sm:$0xff]
        %vm531 = vcmask 261120
        %v533 = vsel %vm531, %v518, 0
        %535 = vmatprep.subr.mxu0 0.0
        %536 = vmatpush1.msra.mxu0 %v527
        %537 = vmatprep.subr.mxu0 0.0
        %538 = vmatpush1.msra.mxu0 %v528
        %539 = vmatprep.subr.mxu0 0.0
        %540 = vmatpush1.msra.mxu0 %v529
        %541 = vmatprep.subr.mxu0 0.0
        %542 = vmatpush1.msra.mxu0 %v530
        %543 = vmatprep.subr.mxu0 0.0
        %544 = vmatpush1.msra.mxu0 0.0
        %545 = vmatprep.subr.mxu0 0.0
        %546 = vmatpush1.msra.mxu0 0.0
        %547 = vmatprep.subr.mxu0 0.0
        %548 = vmatpush1.msra.mxu0 0.0
        %549 = vmatprep.subr.mxu0 0.0
        %550 = vmatpush1.msra.mxu0 0.0
        %551 = vmatprep.subr.mxu0 0.0
        %552 = vmatpush1.msra.mxu0 0.0
        %553 = vmatprep.subr.mxu0 0.0
        %554 = vmatpush1.msra.mxu0 0.0
        %555 = vmatprep.subr.mxu0 0.0
        %556 = vmatpush1.msra.mxu0 0.0
        %557 = vmatprep.subr.mxu0 0.0
        %558 = vmatpush1.msra.mxu0 0.0
        %559 = vmatprep.subr.mxu0 0.0
        %560 = vmatpush1.msra.mxu0 0.0
        %561 = vmatprep.subr.mxu0 0.0
        %562 = vmatpush1.msra.mxu0 0.0
        %563 = vmatprep.subr.mxu0 0.0
        %564 = vmatpush1.msra.mxu0 0.0
        %565 = vmatprep.subr.mxu0 0.0
        %566 = vmatpush1.msra.mxu0 0.0
        %567 = vmatprep.subr.mxu0 0.0
        %568 = vmatpush1.msra.mxu0 0.0
        %569 = vmatprep.subr.mxu0 0.0
        %570 = vmatpush1.msra.mxu0 0.0
        %571 = vmatprep.subr.mxu0 0.0
        %572 = vmatpush1.msra.mxu0 0.0
        %573 = vmatprep.subr.mxu0 0.0
        %574 = vmatpush1.msra.mxu0 0.0
        %575 = vmatprep.subr.mxu0 0.0
        %576 = vmatpush1.msra.mxu0 0.0
        %577 = vmatprep.subr.mxu0 0.0
        %578 = vmatpush1.msra.mxu0 0.0
        %579 = vmatprep.subr.mxu0 0.0
        %580 = vmatpush1.msra.mxu0 0.0
        %581 = vmatprep.subr.mxu0 0.0
        %582 = vmatpush1.msra.mxu0 0.0
        %583 = vmatprep.subr.mxu0 0.0
        %584 = vmatpush1.msra.mxu0 0.0
        %585 = vmatprep.subr.mxu0 0.0
        %586 = vmatpush1.msra.mxu0 0.0
        %587 = vmatprep.subr.mxu0 0.0
        %588 = vmatpush1.msra.mxu0 0.0
        %589 = vmatprep.subr.mxu0 0.0
        %590 = vmatpush1.msra.mxu0 0.0
        %591 = vmatprep.subr.mxu0 0.0
        %592 = vmatpush1.msra.mxu0 0.0
        %593 = vmatprep.subr.mxu0 0.0
        %594 = vmatpush1.msra.mxu0 0.0
        %595 = vmatprep.subr.mxu0 0.0
        %596 = vmatpush1.msra.mxu0 0.0
        %597 = vmatprep.subr.mxu0 0.0
        %598 = vmatpush1.msra.mxu0 0.0
        %599 = vmatprep.mubr.f32.mxu0 0.0
        %600 = vmatmul.mubr.f32.gmra.mrb[0].mxu0 %v533
        %v601 = vpop.f32.mrb[0].mxu0
        %v602 = vadd.f32 0.0, %v601
        %v603 = vpop.f32.mrb[0].mxu0
        %604 = vdwg.mxu0
        %v605 = vld [vmem:[%s508] sm:$0xff]
        %v606 = vld [vmem:[%s508 + $0x8] sm:$0xff]
        %v607 = vld [vmem:[%s508 + $0x10] sm:$0xff]
        %v608 = vld [vmem:[%s508 + $0x18] sm:$0xff]
        %v610 = vsel %vm531, %v519, 0
        %612 = vmatprep.subr.mxu0 0.0
        %613 = vmatpush1.msra.mxu0 %v605
        %614 = vmatprep.subr.mxu0 0.0
        %615 = vmatpush1.msra.mxu0 %v606
        %616 = vmatprep.subr.mxu0 0.0
        %617 = vmatpush1.msra.mxu0 %v607
        %618 = vmatprep.subr.mxu0 0.0
        %619 = vmatpush1.msra.mxu0 %v608
        %620 = vmatprep.subr.mxu0 0.0
        %621 = vmatpush1.msra.mxu0 0.0
        %622 = vmatprep.subr.mxu0 0.0
        %623 = vmatpush1.msra.mxu0 0.0
        %624 = vmatprep.subr.mxu0 0.0
        %625 = vmatpush1.msra.mxu0 0.0
        %626 = vmatprep.subr.mxu0 0.0
        %627 = vmatpush1.msra.mxu0 0.0
        %628 = vmatprep.subr.mxu0 0.0
        %629 = vmatpush1.msra.mxu0 0.0
        %630 = vmatprep.subr.mxu0 0.0
        %631 = vmatpush1.msra.mxu0 0.0
        %632 = vmatprep.subr.mxu0 0.0
        %633 = vmatpush1.msra.mxu0 0.0
        %634 = vmatprep.subr.mxu0 0.0
        %635 = vmatpush1.msra.mxu0 0.0
        %636 = vmatprep.subr.mxu0 0.0
        %637 = vmatpush1.msra.mxu0 0.0
        %638 = vmatprep.subr.mxu0 0.0
        %639 = vmatpush1.msra.mxu0 0.0
        %640 = vmatprep.subr.mxu0 0.0
        %641 = vmatpush1.msra.mxu0 0.0
        %642 = vmatprep.subr.mxu0 0.0
        %643 = vmatpush1.msra.mxu0 0.0
        %644 = vmatprep.subr.mxu0 0.0
        %645 = vmatpush1.msra.mxu0 0.0
        %646 = vmatprep.subr.mxu0 0.0
        %647 = vmatpush1.msra.mxu0 0.0
        %648 = vmatprep.subr.mxu0 0.0
        %649 = vmatpush1.msra.mxu0 0.0
        %650 = vmatprep.subr.mxu0 0.0
        %651 = vmatpush1.msra.mxu0 0.0
        %652 = vmatprep.subr.mxu0 0.0
        %653 = vmatpush1.msra.mxu0 0.0
        %654 = vmatprep.subr.mxu0 0.0
        %655 = vmatpush1.msra.mxu0 0.0
        %656 = vmatprep.subr.mxu0 0.0
        %657 = vmatpush1.msra.mxu0 0.0
        %658 = vmatprep.subr.mxu0 0.0
        %659 = vmatpush1.msra.mxu0 0.0
        %660 = vmatprep.subr.mxu0 0.0
        %661 = vmatpush1.msra.mxu0 0.0
        %662 = vmatprep.subr.mxu0 0.0
        %663 = vmatpush1.msra.mxu0 0.0
        %664 = vmatprep.subr.mxu0 0.0
        %665 = vmatpush1.msra.mxu0 0.0
        %666 = vmatprep.subr.mxu0 0.0
        %667 = vmatpush1.msra.mxu0 0.0
        %668 = vmatprep.subr.mxu0 0.0
        %669 = vmatpush1.msra.mxu0 0.0
        %670 = vmatprep.subr.mxu0 0.0
        %671 = vmatpush1.msra.mxu0 0.0
        %672 = vmatprep.subr.mxu0 0.0
        %673 = vmatpush1.msra.mxu0 0.0
        %674 = vmatprep.subr.mxu0 0.0
        %675 = vmatpush1.msra.mxu0 0.0
        %676 = vmatprep.mubr.f32.mxu0 0.0
        %677 = vmatmul.mubr.f32.gmra.mrb[0].mxu0 %v610
        %v678 = vpop.f32.mrb[0].mxu0
        %v679 = vadd.f32 0.0, %v678
        %v680 = vpop.f32.mrb[0].mxu0
        %681 = vdwg.mxu0
        %v682 = vld [vmem:[%s513] sm:$0xff]
        %v683 = vld [vmem:[%s513 + $0x8] sm:$0xff]
        %v684 = vld [vmem:[%s513 + $0x10] sm:$0xff]
        %v685 = vld [vmem:[%s513 + $0x18] sm:$0xff]
        %v687 = vsel %vm531, %v520, 0
        %689 = vmatprep.subr.mxu0 0.0
        %690 = vmatpush1.msra.mxu0 %v682
        %691 = vmatprep.subr.mxu0 0.0
        %692 = vmatpush1.msra.mxu0 %v683
        %693 = vmatprep.subr.mxu0 0.0
        %694 = vmatpush1.msra.mxu0 %v684
        %695 = vmatprep.subr.mxu0 0.0
        %696 = vmatpush1.msra.mxu0 %v685
        %697 = vmatprep.subr.mxu0 0.0
        %698 = vmatpush1.msra.mxu0 0.0
        %699 = vmatprep.subr.mxu0 0.0
        %700 = vmatpush1.msra.mxu0 0.0
        %701 = vmatprep.subr.mxu0 0.0
        %702 = vmatpush1.msra.mxu0 0.0
        %703 = vmatprep.subr.mxu0 0.0
        %704 = vmatpush1.msra.mxu0 0.0
        %705 = vmatprep.subr.mxu0 0.0
        %706 = vmatpush1.msra.mxu0 0.0
        %707 = vmatprep.subr.mxu0 0.0
        %708 = vmatpush1.msra.mxu0 0.0
        %709 = vmatprep.subr.mxu0 0.0
        %710 = vmatpush1.msra.mxu0 0.0
        %711 = vmatprep.subr.mxu0 0.0
        %712 = vmatpush1.msra.mxu0 0.0
        %713 = vmatprep.subr.mxu0 0.0
        %714 = vmatpush1.msra.mxu0 0.0
        %715 = vmatprep.subr.mxu0 0.0
        %716 = vmatpush1.msra.mxu0 0.0
        %717 = vmatprep.subr.mxu0 0.0
        %718 = vmatpush1.msra.mxu0 0.0
        %719 = vmatprep.subr.mxu0 0.0
        %720 = vmatpush1.msra.mxu0 0.0
        %721 = vmatprep.subr.mxu0 0.0
        %722 = vmatpush1.msra.mxu0 0.0
        %723 = vmatprep.subr.mxu0 0.0
        %724 = vmatpush1.msra.mxu0 0.0
        %725 = vmatprep.subr.mxu0 0.0
        %726 = vmatpush1.msra.mxu0 0.0
        %727 = vmatprep.subr.mxu0 0.0
        %728 = vmatpush1.msra.mxu0 0.0
        %729 = vmatprep.subr.mxu0 0.0
        %730 = vmatpush1.msra.mxu0 0.0
        %731 = vmatprep.subr.mxu0 0.0
        %732 = vmatpush1.msra.mxu0 0.0
        %733 = vmatprep.subr.mxu0 0.0
        %734 = vmatpush1.msra.mxu0 0.0
        %735 = vmatprep.subr.mxu0 0.0
        %736 = vmatpush1.msra.mxu0 0.0
        %737 = vmatprep.subr.mxu0 0.0
        %738 = vmatpush1.msra.mxu0 0.0
        %739 = vmatprep.subr.mxu0 0.0
        %740 = vmatpush1.msra.mxu0 0.0
        %741 = vmatprep.subr.mxu0 0.0
        %742 = vmatpush1.msra.mxu0 0.0
        %743 = vmatprep.subr.mxu0 0.0
        %744 = vmatpush1.msra.mxu0 0.0
        %745 = vmatprep.subr.mxu0 0.0
        %746 = vmatpush1.msra.mxu0 0.0
        %747 = vmatprep.subr.mxu0 0.0
        %748 = vmatpush1.msra.mxu0 0.0
        %749 = vmatprep.subr.mxu0 0.0
        %750 = vmatpush1.msra.mxu0 0.0
        %751 = vmatprep.subr.mxu0 0.0
        %752 = vmatpush1.msra.mxu0 0.0
        %753 = vmatprep.mubr.f32.mxu0 0.0
        %754 = vmatmul.mubr.f32.gmra.mrb[0].mxu0 %v687
        %v755 = vpop.f32.mrb[0].mxu0
        %v756 = vadd.f32 0.0, %v755
        %v757 = vpop.f32.mrb[0].mxu0
        %758 = vdwg.mxu0
        %vm759 = vcmask 64512
        %v761 = vsel %vm759, %v602, 0
        %v764 = vsel %vm759, %v679, 0
        %766 = vmatprep.subr.mxu0 0.0
        %767 = vmatpush1.xpose.msra.mxu0 %v764
        %768 = vmatprep.subr.mxu0 0.0
        %769 = vmatpush1.xpose.msra.mxu0 0.0
        %770 = vmatprep.subr.mxu0 0.0
        %771 = vmatpush1.xpose.msra.mxu0 0.0
        %772 = vmatprep.subr.mxu0 0.0
        %773 = vmatpush1.xpose.msra.mxu0 0.0
        %774 = vmatprep.subr.mxu0 0.0
        %775 = vmatpush1.xpose.msra.mxu0 0.0
        %776 = vmatprep.subr.mxu0 0.0
        %777 = vmatpush1.xpose.msra.mxu0 0.0
        %778 = vmatprep.subr.mxu0 0.0
        %779 = vmatpush1.xpose.msra.mxu0 0.0
        %780 = vmatprep.subr.mxu0 0.0
        %781 = vmatpush1.xpose.msra.mxu0 0.0
        %782 = vmatprep.subr.mxu0 0.0
        %783 = vmatpush1.xpose.msra.mxu0 0.0
        %784 = vmatprep.subr.mxu0 0.0
        %785 = vmatpush1.xpose.msra.mxu0 0.0
        %786 = vmatprep.subr.mxu0 0.0
        %787 = vmatpush1.xpose.msra.mxu0 0.0
        %788 = vmatprep.subr.mxu0 0.0
        %789 = vmatpush1.xpose.msra.mxu0 0.0
        %790 = vmatprep.subr.mxu0 0.0
        %791 = vmatpush1.xpose.msra.mxu0 0.0
        %792 = vmatprep.subr.mxu0 0.0
        %793 = vmatpush1.xpose.msra.mxu0 0.0
        %794 = vmatprep.subr.mxu0 0.0
        %795 = vmatpush1.xpose.msra.mxu0 0.0
        %796 = vmatprep.subr.mxu0 0.0
        %797 = vmatpush1.xpose.msra.mxu0 0.0
        %798 = vmatprep.subr.mxu0 0.0
        %799 = vmatpush1.xpose.msra.mxu0 0.0
        %800 = vmatprep.subr.mxu0 0.0
        %801 = vmatpush1.xpose.msra.mxu0 0.0
        %802 = vmatprep.subr.mxu0 0.0
        %803 = vmatpush1.xpose.msra.mxu0 0.0
        %804 = vmatprep.subr.mxu0 0.0
        %805 = vmatpush1.xpose.msra.mxu0 0.0
        %806 = vmatprep.subr.mxu0 0.0
        %807 = vmatpush1.xpose.msra.mxu0 0.0
        %808 = vmatprep.subr.mxu0 0.0
        %809 = vmatpush1.xpose.msra.mxu0 0.0
        %810 = vmatprep.subr.mxu0 0.0
        %811 = vmatpush1.xpose.msra.mxu0 0.0
        %812 = vmatprep.subr.mxu0 0.0
        %813 = vmatpush1.xpose.msra.mxu0 0.0
        %814 = vmatprep.subr.mxu0 0.0
        %815 = vmatpush1.xpose.msra.mxu0 0.0
        %816 = vmatprep.subr.mxu0 0.0
        %817 = vmatpush1.xpose.msra.mxu0 0.0
        %818 = vmatprep.subr.mxu0 0.0
        %819 = vmatpush1.xpose.msra.mxu0 0.0
        %820 = vmatprep.subr.mxu0 0.0
        %821 = vmatpush1.xpose.msra.mxu0 0.0
        %822 = vmatprep.subr.mxu0 0.0
        %823 = vmatpush1.xpose.msra.mxu0 0.0
        %824 = vmatprep.subr.mxu0 0.0
        %825 = vmatpush1.xpose.msra.mxu0 0.0
        %826 = vmatprep.subr.mxu0 0.0
        %827 = vmatpush1.xpose.msra.mxu0 0.0
        %828 = vmatprep.subr.mxu0 0.0
        %829 = vmatpush1.xpose.msra.mxu0 0.0
        %830 = vmatprep.mubr.f32.mxu0 0.0
        %831 = vmatmul.mubr.f32.gmra.mrb[0].mxu0 %v761
        %v832 = vpop.f32.mrb[0].mxu0
        %v833 = vadd.f32 0.0, %v832
        %v834 = vpop.f32.mrb[0].mxu0
        %835 = vdwg.mxu0
        %v836 = vsel %vm759, %v833, -inf
        %837 = vmax.xlane.f32.xlu0 %v836
        %v838 = vpop.xlane.xlu0 %837
        %v839 = vsub.f32 %v833, %v838
        %v840 = vmul.f32 %v839, 1.442695
        %v841 = vpow.pop %v840
        %v842 = vsel %vm759, %v841, 0.0
        %843 = vadd.xlane.f32.xlu0 %v842
        %v844 = vpop.xlane.xlu0 %843
        %v845 = vrcp.pop %v844
        %v846 = vmul.f32 %v844, %v845
        %v847 = vsub.f32 2.0, %v846
        %v848 = vmul.f32 %v845, %v847
        %v849 = vmul.f32 %v841, %v848
        %850 = vst.msk [vmem:[%s486] sm:$0xff] %vm759, %v849
        %v852 = vsel %vm759, %v849, 0
        %854 = vmatprep.subr.mxu0 0.0
        %855 = vmatpush1.msra.mxu0 %v756
        %856 = vmatprep.subr.mxu0 0.0
        %857 = vmatpush1.msra.mxu0 0.0
        %858 = vmatprep.subr.mxu0 0.0
        %859 = vmatpush1.msra.mxu0 0.0
        %860 = vmatprep.subr.mxu0 0.0
        %861 = vmatpush1.msra.mxu0 0.0
        %862 = vmatprep.subr.mxu0 0.0
        %863 = vmatpush1.msra.mxu0 0.0
        %864 = vmatprep.subr.mxu0 0.0
        %865 = vmatpush1.msra.mxu0 0.0
        %866 = vmatprep.subr.mxu0 0.0
        %867 = vmatpush1.msra.mxu0 0.0
        %868 = vmatprep.subr.mxu0 0.0
        %869 = vmatpush1.msra.mxu0 0.0
        %870 = vmatprep.subr.mxu0 0.0
        %871 = vmatpush1.msra.mxu0 0.0
        %872 = vmatprep.subr.mxu0 0.0
        %873 = vmatpush1.msra.mxu0 0.0
        %874 = vmatprep.subr.mxu0 0.0
        %875 = vmatpush1.msra.mxu0 0.0
        %876 = vmatprep.subr.mxu0 0.0
        %877 = vmatpush1.msra.mxu0 0.0
        %878 = vmatprep.subr.mxu0 0.0
        %879 = vmatpush1.msra.mxu0 0.0
        %880 = vmatprep.subr.mxu0 0.0
        %881 = vmatpush1.msra.mxu0 0.0
        %882 = vmatprep.subr.mxu0 0.0
        %883 = vmatpush1.msra.mxu0 0.0
        %884 = vmatprep.subr.mxu0 0.0
        %885 = vmatpush1.msra.mxu0 0.0
        %886 = vmatprep.subr.mxu0 0.0
        %887 = vmatpush1.msra.mxu0 0.0
        %888 = vmatprep.subr.mxu0 0.0
        %889 = vmatpush1.msra.mxu0 0.0
        %890 = vmatprep.subr.mxu0 0.0
        %891 = vmatpush1.msra.mxu0 0.0
        %892 = vmatprep.subr.mxu0 0.0
        %893 = vmatpush1.msra.mxu0 0.0
        %894 = vmatprep.subr.mxu0 0.0
        %895 = vmatpush1.msra.mxu0 0.0
        %896 = vmatprep.subr.mxu0 0.0
        %897 = vmatpush1.msra.mxu0 0.0
        %898 = vmatprep.subr.mxu0 0.0
        %899 = vmatpush1.msra.mxu0 0.0
        %900 = vmatprep.subr.mxu0 0.0
        %901 = vmatpush1.msra.mxu0 0.0
        %902 = vmatprep.subr.mxu0 0.0
        %903 = vmatpush1.msra.mxu0 0.0
        %904 = vmatprep.subr.mxu0 0.0
        %905 = vmatpush1.msra.mxu0 0.0
        %906 = vmatprep.subr.mxu0 0.0
        %907 = vmatpush1.msra.mxu0 0.0
        %908 = vmatprep.subr.mxu0 0.0
        %909 = vmatpush1.msra.mxu0 0.0
        %910 = vmatprep.subr.mxu0 0.0
        %911 = vmatpush1.msra.mxu0 0.0
        %912 = vmatprep.subr.mxu0 0.0
        %913 = vmatpush1.msra.mxu0 0.0
        %914 = vmatprep.subr.mxu0 0.0
        %915 = vmatpush1.msra.mxu0 0.0
        %916 = vmatprep.subr.mxu0 0.0
        %917 = vmatpush1.msra.mxu0 0.0
        %918 = vmatprep.mubr.f32.mxu0 0.0
        %919 = vmatmul.mubr.f32.gmra.mrb[0].mxu0 %v852
        %v920 = vpop.f32.mrb[0].mxu0
        %v921 = vadd.f32 0.0, %v920
        %v922 = vpop.f32.mrb[0].mxu0
        %923 = vdwg.mxu0
        %v924 = vld [vmem:[#allocation2] sm:$0xff]
        %v925 = vld [vmem:[%s517] sm:$0xff]
        %v927 = vsel %vm759, %v921, 0
        %929 = vmatprep.subr.mxu0 0.0
        %930 = vmatpush1.msra.mxu0 %v925
        %931 = vmatprep.subr.mxu0 0.0
        %932 = vmatpush1.msra.mxu0 0.0
        %933 = vmatprep.subr.mxu0 0.0
        %934 = vmatpush1.msra.mxu0 0.0
        %935 = vmatprep.subr.mxu0 0.0
        %936 = vmatpush1.msra.mxu0 0.0
        %937 = vmatprep.subr.mxu0 0.0
        %938 = vmatpush1.msra.mxu0 0.0
        %939 = vmatprep.subr.mxu0 0.0
        %940 = vmatpush1.msra.mxu0 0.0
        %941 = vmatprep.subr.mxu0 0.0
        %942 = vmatpush1.msra.mxu0 0.0
        %943 = vmatprep.subr.mxu0 0.0
        %944 = vmatpush1.msra.mxu0 0.0
        %945 = vmatprep.subr.mxu0 0.0
        %946 = vmatpush1.msra.mxu0 0.0
        %947 = vmatprep.subr.mxu0 0.0
        %948 = vmatpush1.msra.mxu0 0.0
        %949 = vmatprep.subr.mxu0 0.0
        %950 = vmatpush1.msra.mxu0 0.0
        %951 = vmatprep.subr.mxu0 0.0
        %952 = vmatpush1.msra.mxu0 0.0
        %953 = vmatprep.subr.mxu0 0.0
        %954 = vmatpush1.msra.mxu0 0.0
        %955 = vmatprep.subr.mxu0 0.0
        %956 = vmatpush1.msra.mxu0 0.0
        %957 = vmatprep.subr.mxu0 0.0
        %958 = vmatpush1.msra.mxu0 0.0
        %959 = vmatprep.subr.mxu0 0.0
        %960 = vmatpush1.msra.mxu0 0.0
        %961 = vmatprep.subr.mxu0 0.0
        %962 = vmatpush1.msra.mxu0 0.0
        %963 = vmatprep.subr.mxu0 0.0
        %964 = vmatpush1.msra.mxu0 0.0
        %965 = vmatprep.subr.mxu0 0.0
        %966 = vmatpush1.msra.mxu0 0.0
        %967 = vmatprep.subr.mxu0 0.0
        %968 = vmatpush1.msra.mxu0 0.0
        %969 = vmatprep.subr.mxu0 0.0
        %970 = vmatpush1.msra.mxu0 0.0
        %971 = vmatprep.subr.mxu0 0.0
        %972 = vmatpush1.msra.mxu0 0.0
        %973 = vmatprep.subr.mxu0 0.0
        %974 = vmatpush1.msra.mxu0 0.0
        %975 = vmatprep.subr.mxu0 0.0
        %976 = vmatpush1.msra.mxu0 0.0
        %977 = vmatprep.subr.mxu0 0.0
        %978 = vmatpush1.msra.mxu0 0.0
        %979 = vmatprep.subr.mxu0 0.0
        %980 = vmatpush1.msra.mxu0 0.0
        %981 = vmatprep.subr.mxu0 0.0
        %982 = vmatpush1.msra.mxu0 0.0
        %983 = vmatprep.subr.mxu0 0.0
        %984 = vmatpush1.msra.mxu0 0.0
        %985 = vmatprep.subr.mxu0 0.0
        %986 = vmatpush1.msra.mxu0 0.0
        %987 = vmatprep.subr.mxu0 0.0
        %988 = vmatpush1.msra.mxu0 0.0
        %989 = vmatprep.subr.mxu0 0.0
        %990 = vmatpush1.msra.mxu0 0.0
        %991 = vmatprep.subr.mxu0 0.0
        %992 = vmatpush1.msra.mxu0 0.0
        %993 = vmatprep.mubr.f32.mxu0 0.0
        %994 = vmatmul.mubr.f32.gmra.mrb[0].mxu0 %v927
        %v995 = vpop.f32.mrb[0].mxu0
        %v996 = vadd.f32 0.0, %v995
        %v997 = vpop.f32.mrb[0].mxu0
        %998 = vdwg.mxu0
        %v999 = vadd.f32 %v924, %v996
        %1000 = vst.msk [vmem:[#allocation2] sm:$0xff] %vm531, %v999
        %p1001 = scmp.eq.s32.totalorder %s34, 3
        // Predicated region
        $region65: #{tpu_custom_call.1} parent=59 // pred_check
          %p1002 = pneg %p1001
        $region66: #{tpu_custom_call.1} parent=59 // pred_check_branch
          %1004 = sbr.rel (%p1002) target = $region68
        $region67: #{tpu_custom_call.1} parent=59 // pred_region
          %v1005 = vld [vmem:[#allocation2] sm:$0xff]
          %v1006 = vld [vmem:[%s7] sm:$0x1]
          %v1008 = vlaneseq
          %v1009 = vshrl.u32 %v1008, 7
          %v1010 = vsub.s32 0, %v1009
          %v1011 = vrot.slane %v1006, %v1010
          %v1013 = vadd.f32 %v1005, %v1011
          %v1014 = vadd.f32 %v1013, %v518
          %v1015 = vsel %vm531, %v1014, 0.0
          %1016 = vadd.xlane.f32.xlu0 %v1015
          %v1017 = vpop.xlane.xlu0 %1016
          %v1018 = vrcp.pop 32.0
          %v1019 = vmul.f32 %v1017, %v1018
          %v1020 = vsub.f32 %v1014, %v1019
          %v1021 = vmul.f32 %v1020, %v1020
          %v1022 = vsel %vm531, %v1021, 0.0
          %1023 = vadd.xlane.f32.xlu0 %v1022
          %v1024 = vpop.xlane.xlu0 %1023
          %v1025 = vrcp.pop 31.0
          %v1026 = vmul.f32 %v1024, %v1025
          %v1027 = vrsqrt.pop %v1026
          %v1028 = vmul.f32 %v1026, %v1027
          %vm1029 = vcmp.eq.f32.partialorder %v1026, inf
          %v1030 = vsel %vm1029, %v1026, %v1028
          %vm1031 = vcmp.eq.f32.partialorder %v1026, 0.0
          %v1032 = vand.u32 %v1026, 2147483648
          %v1033 = vsel %vm1031, %v1032, %v1030
          %v1034 = vadd.f32 %v1033, 0.001
          %v1035 = vrcp.pop %v1034
          %v1036 = vmul.f32 %v1020, %v1035
          %v1037 = vld [vmem:[%s8] sm:$0x1]
          %v1039 = vlaneseq
          %v1040 = vshrl.u32 %v1039, 7
          %v1041 = vsub.s32 0, %v1040
          %v1042 = vrot.slane %v1037, %v1041
          %v1044 = vmul.f32 %v1036, %v1042
          %v1045 = vld [vmem:[%s9] sm:$0x1]
          %v1047 = vlaneseq
          %v1048 = vshrl.u32 %v1047, 7
          %v1049 = vsub.s32 0, %v1048
          %v1050 = vrot.slane %v1045, %v1049
          %v1052 = vadd.f32 %v1044, %v1050
          %1053 = vst.msk [vmem:[%s479] sm:$0xff] %vm531, %v1052
        $region68: #{tpu_custom_call.1} parent=59 // pred_fallthru
          _
        %s1054 = sand.u32 %s294, 1
        %s1055 = scalar_lea.sflag [#allocation4], %s1054
        %s1056 = sand.u32 %s294, 1
        %s1057 = smul.addr %s1056, 8
        %s1058 = scalar_lea.vmem [#allocation3], %s1057
        %s1059 = sand.u32 %s322, 1
        %s1060 = scalar_lea.sflag [#allocation6], %s1059
        %s1061 = sand.u32 %s322, 1
        %s1062 = smul.addr %s1061, 8
        %s1063 = scalar_lea.vmem [#allocation5], %s1062
        // Predicated region
        $region69: #{tpu_custom_call.1} parent=59 // pred_check
          %p1064 = pneg %p304
        $region70: #{tpu_custom_call.1} parent=59 // pred_check_branch
          %1066 = sbr.rel (%p1064) target = $region72
        $region71: #{tpu_custom_call.1} parent=59 // pred_region
          %s1068 = ssub.s32 128, 128
          %1069 = vsyncadd %s1055, %s1068
          %s1070 = smul.addr %s33, 128
          %s1071 = scalar_lea.hbm %s10, %s1070
          %s1073 = sshll.u32 %s1058, 4
          %s1074 = int_to_ptr.vmem [resolvable:$true] %s1073
          %1076 = dma.vmem_to_hbm [thread:$0]  %s1074, 128, %s1071, %s1055
        $region72: #{tpu_custom_call.1} parent=59 // pred_fallthru
          _
        // Predicated region
        $region73: #{tpu_custom_call.1} parent=59 // pred_check
          %p1077 = pneg %p332
        $region74: #{tpu_custom_call.1} parent=59 // pred_check_branch
          %1079 = sbr.rel (%p1077) target = $region76
        $region75: #{tpu_custom_call.1} parent=59 // pred_region
          %s1081 = ssub.s32 128, 128
          %1082 = vsyncadd %s1060, %s1081
          %s1083 = smul.addr %s34, 2
          %s1084 = sadd.s32 %s33, %s1083
          %s1085 = smul.addr %s1084, 128
          %s1086 = scalar_lea.hbm %s11, %s1085
          %s1088 = sshll.u32 %s1063, 4
          %s1089 = int_to_ptr.vmem [resolvable:$true] %s1088
          %1091 = dma.vmem_to_hbm [thread:$0]  %s1089, 128, %s1086, %s1060
        $region76: #{tpu_custom_call.1} parent=59 // pred_fallthru
          _
      $region60: #{tpu_custom_call.1} parent=5 // pred_fallthru
        _
      %p1092 = scmp.le.s32.totalorder 2, %s24
      // Predicated region
      $region77: #{tpu_custom_call.1} parent=5 // pred_check
        %p1093 = pneg %p1092
      $region78: #{tpu_custom_call.1} parent=5 // pred_check_branch
        %1095 = sbr.rel (%p1093) target = $region80
      $region79: #{tpu_custom_call.1} parent=5 // pred_region
        %s1096 = ssub.s32 %s24, 2
        // Predicated region
        $region81: #{tpu_custom_call.1} parent=79 // pred_check
          %p1097 = pneg %p310
        $region82: #{tpu_custom_call.1} parent=79 // pred_check_branch
          %1099 = sbr.rel (%p1097) target = $region84
        $region83: #{tpu_custom_call.1} parent=79 // pred_region
          %s1100 = sand.u32 %s295, 1
          %s1101 = scalar_lea.sflag [#allocation4], %s1100
          %s1102 = sand.u32 %s295, 1
          %s1103 = smul.addr %s1102, 8
          %s1104 = scalar_lea.vmem [#allocation3], %s1103
          %1105 = dma.done %s1101, 128
        $region84: #{tpu_custom_call.1} parent=79 // pred_fallthru
          _
        // Predicated region
        $region85: #{tpu_custom_call.1} parent=79 // pred_check
          %p1106 = pneg %p338
        $region86: #{tpu_custom_call.1} parent=79 // pred_check_branch
          %1108 = sbr.rel (%p1106) target = $region88
        $region87: #{tpu_custom_call.1} parent=79 // pred_region
          %s1109 = sand.u32 %s323, 1
          %s1110 = scalar_lea.sflag [#allocation6], %s1109
          %s1111 = sand.u32 %s323, 1
          %s1112 = smul.addr %s1111, 8
          %s1113 = scalar_lea.vmem [#allocation5], %s1112
          %1114 = dma.done %s1110, 128
        $region88: #{tpu_custom_call.1} parent=79 // pred_fallthru
          _
      $region80: #{tpu_custom_call.1} parent=5 // pred_fallthru
        _
    $region6: #{tpu_custom_call.1} parent=1 // loop_footer
      %s28 = sadd.s32 1, %s24
    $region7: #{tpu_custom_call.1} parent=1 // loop_footer_branch
      %23 = sbr.rel target = $region3
    $region8: #{tpu_custom_call.1} parent=1 // loop_exit
      _
    %1115 = vsyncpa [#allocation4], 1
    %s1116 = scalar_lea.sflag [#allocation4], 1
    %1117 = vsyncpa %s1116, 1
    %1118 = vsyncpa [#allocation6], 1
    %s1119 = scalar_lea.sflag [#allocation6], 1
    %1120 = vsyncpa %s1119, 1

</llo_original>
